<compile_context>
chip_gen: v7x
topology: tpu7x:2x2x1
jax: 0.10.0
libtpu: 0.0.40
codegen_flags: <defaults>
</compile_context>

<pallas_src>
import functools
import math

import jax
import jax.numpy as jnp
from jax.experimental import pallas as pl
from jax.experimental.pallas import tpu as pltpu

# >= the default scoped VMEM limit on every generation, <= v7x physical VMEM.
_VMEM_LIMIT_BYTES = 32 * 1024 * 1024


def _round_up(x, m):
    return ((x + m - 1) // m) * m


# --------------------------- dense QKV projection ---------------------------

def _dense_kernel(x_ref, w_ref, b_ref, o_ref):
    # x @ W + b, accumulated in f32 on the MXU.
    acc = jnp.dot(x_ref[...], w_ref[...], preferred_element_type=jnp.float32)
    acc = acc + b_ref[...].astype(jnp.float32)
    o_ref[...] = acc.astype(o_ref.dtype)


def _dense(x2, w, b, row_tile):
    """x2: [rows, D_in]; w: [D_in, D_out] (already x@W layout); b: [D_out]."""
    rows, d_in = x2.shape
    d_out = w.shape[1]

    rt = min(row_tile, _round_up(rows, 8))     # multiple of 8, capped by row_tile
    rows_p = _round_up(rows, rt)
    if rows_p != rows:
        x2 = jnp.pad(x2, ((0, rows_p - rows), (0, 0)))

    out = pl.pallas_call(
        _dense_kernel,
        out_shape=jax.ShapeDtypeStruct((rows_p, d_out), x2.dtype),
        grid_spec=pltpu.PrefetchScalarGridSpec(
            num_scalar_prefetch=0,
            grid=(rows_p // rt,),
            in_specs=[
                pl.BlockSpec((rt, d_in), lambda i: (i, 0)),      # activation rows
                # Resident weight / bias (constant index_map; the pipeline does
                # not re-fetch them between consecutive grid steps).
                pl.BlockSpec((d_in, d_out), lambda i: (0, 0)),
                pl.BlockSpec((1, d_out), lambda i: (0, 0)),
            ],
            out_specs=pl.BlockSpec((rt, d_out), lambda i: (i, 0)),
        ),
        compiler_params=pltpu.CompilerParams(
            dimension_semantics=("parallel",),
            vmem_limit_bytes=_VMEM_LIMIT_BYTES),
    )(x2, w, b.reshape(1, d_out))
    return out[:rows]


# ------------------------------- attention ----------------------------------

def _attention_kernel(q_ref, k_ref, v_ref, m_ref, o_ref, *, scale):
    # q: [tq, hd]; k, v: [L, hd]; m: [tq, L] raw 0/1 mask.
    q = q_ref[...]
    k = k_ref[...]
    v = v_ref[...]

    # Q @ K^T without materializing a transpose (contract over head_dim).
    s = jax.lax.dot_general(q, k, (((1,), (1,)), ((), ())),
                            preferred_element_type=jnp.float32)
    s = s * scale + (1.0 - m_ref[...].astype(jnp.float32)) * (-10000.0)

    # Numerically-stable softmax over keys.
    s_max = jnp.max(s, axis=-1, keepdims=True)
    p = jnp.exp(s - s_max)
    denom = jnp.sum(p, axis=-1, keepdims=True)
    probs = p * pl.reciprocal(denom, approx=False)

    # TODO(synk): training-mode attention dropout (pltpu.prng_*) not emitted;
    # eval-mode dropout is the identity.

    ctx = jnp.dot(probs.astype(v.dtype), v, preferred_element_type=jnp.float32)
    o_ref[...] = ctx.astype(o_ref.dtype)


def bert_self_attention(query_states, key_states, value_states, attention_mask,
                        wq, bq, wk, bk, wv, bv, *,
                        num_heads, row_tile=256, q_tile=256):
    """query_states: [N,Lq,D]; key/value_states: [N,L,D]; attention_mask: [N,Lq,L]
    (1 = attend, 0 = masked). Weights are pre-transposed to x @ W layout."""
    N, Lq, D = query_states.shape
    L = key_states.shape[1]
    assert D % num_heads == 0
    hd = D // num_heads

    # QKV projections via the row-tiled dense kernel.
    q2 = _dense(query_states.reshape(N * Lq, D), wq, bq, row_tile)
    k2 = _dense(key_states.reshape(N * L, D), wk, bk, row_tile)
    v2 = _dense(value_states.reshape(N * L, D), wv, bv, row_tile)

    # transpose_for_scores -> [N, num_heads, seq, head_dim]
    q4 = q2.reshape(N, Lq, num_heads, hd).transpose(0, 2, 1, 3)
    k4 = k2.reshape(N, L, num_heads, hd).transpose(0, 2, 1, 3)
    v4 = v2.reshape(N, L, num_heads, hd).transpose(0, 2, 1, 3)

    # Pad Lq so the query tile divides it; padded rows are discarded later.
    tq = min(q_tile, _round_up(Lq, 8))
    Lq_p = _round_up(Lq, tq)
    mask = attention_mask.astype(query_states.dtype)
    if Lq_p != Lq:
        q4 = jnp.pad(q4, ((0, 0), (0, 0), (0, Lq_p - Lq), (0, 0)))
        mask = jnp.pad(mask, ((0, 0), (0, Lq_p - Lq), (0, 0)))

    scale = 1.0 / math.sqrt(hd)
    grid = (N, num_heads, Lq_p // tq)

    ctx4 = pl.pallas_call(
        functools.partial(_attention_kernel, scale=scale),
        out_shape=jax.ShapeDtypeStruct((N, num_heads, Lq_p, hd),
                                       query_states.dtype),
        grid_spec=pltpu.PrefetchScalarGridSpec(
            num_scalar_prefetch=0,
            grid=grid,
            in_specs=[
                # q-tile for this (batch, head)
                pl.BlockSpec((None, None, tq, hd),
                             lambda n, h, qi: (n, h, qi, 0)),
                # full K / V for this (batch, head); index ignores qi so they
                # stay resident in VMEM across consecutive q-tiles.
                pl.BlockSpec((None, None, L, hd),
                             lambda n, h, qi: (n, h, 0, 0)),
                pl.BlockSpec((None, None, L, hd),
                             lambda n, h, qi: (n, h, 0, 0)),
                # raw 0/1 mask rows for this q-tile (shared across heads)
                pl.BlockSpec((None, tq, L),
                             lambda n, h, qi: (n, qi, 0)),
            ],
            out_specs=pl.BlockSpec((None, None, tq, hd),
                                   lambda n, h, qi: (n, h, qi, 0)),
        ),
        compiler_params=pltpu.CompilerParams(
            dimension_semantics=("parallel", "parallel", "parallel"),
            vmem_limit_bytes=_VMEM_LIMIT_BYTES),
    )(q4, k4, v4, mask)

    ctx = ctx4[:, :, :Lq, :].transpose(0, 2, 1, 3).reshape(N, Lq, D)
    return ctx


# ------------------------------- reference ----------------------------------

def _reference(query_states, key_states, value_states, attention_mask,
               wq, bq, wk, bk, wv, bv, num_heads):
    N, Lq, D = query_states.shape
    L = key_states.shape[1]
    hd = D // num_heads
    q = (query_states @ wq + bq).reshape(N, Lq, num_heads, hd).transpose(0, 2, 1, 3)
    k = (key_states @ wk + bk).reshape(N, L, num_heads, hd).transpose(0, 2, 1, 3)
    v = (value_states @ wv + bv).reshape(N, L, num_heads, hd).transpose(0, 2, 1, 3)
    scores = jnp.einsum('nhqd,nhkd->nhqk', q, k) / math.sqrt(hd)
    scores = scores + (1.0 - attention_mask[:, None, :, :]) * (-10000.0)
    probs = jax.nn.softmax(scores, axis=-1)
    ctx = jnp.einsum('nhqk,nhkd->nhqd', probs, v)
    return ctx.transpose(0, 2, 1, 3).reshape(N, Lq, D)


if __name__ == "__main__":
    N, Lq, L, D, NH = 2, 8, 16, 32, 4

    key = jax.random.PRNGKey(0)
    k0, k1, k2, k3, k4, k5, k6, k7 = jax.random.split(key, 8)

    query_states = jax.random.normal(k0, (N, Lq, D), dtype=jnp.float32)
    key_states = jax.random.normal(k1, (N, L, D), dtype=jnp.float32)
    value_states = jax.random.normal(k2, (N, L, D), dtype=jnp.float32)
    attention_mask = (jax.random.uniform(k3, (N, Lq, L)) > 0.3).astype(jnp.float32)
    attention_mask = attention_mask.at[..., 0].set(1.0)   # >=1 valid key per query

    # nn.Linear(D, D): weight [D_out, D_in]; pre-transpose to x @ W layout.
    wq = (jax.random.normal(k4, (D, D), dtype=jnp.float32) * 0.05).T
    wk = (jax.random.normal(k5, (D, D), dtype=jnp.float32) * 0.05).T
    wv = (jax.random.normal(k6, (D, D), dtype=jnp.float32) * 0.05).T
    kb1, kb2, kb3 = jax.random.split(k7, 3)
    bq = jax.random.normal(kb1, (D,), dtype=jnp.float32) * 0.05
    bk = jax.random.normal(kb2, (D,), dtype=jnp.float32) * 0.05
    bv = jax.random.normal(kb3, (D,), dtype=jnp.float32) * 0.05

    out = bert_self_attention(query_states, key_states, value_states,
                              attention_mask, wq, bq, wk, bk, wv, bv,
                              num_heads=NH)
    jax.block_until_ready(out)

    ref = _reference(query_states, key_states, value_states, attention_mask,
                     wq, bq, wk, bk, wv, bv, NH)
    assert out.shape == (N, Lq, D)
    err = float(jnp.max(jnp.abs(out - ref)))
    assert jnp.allclose(out, ref, atol=1e-4, rtol=1e-4), (
        "mismatch vs reference, max abs err = %e" % err)

    print("KERNEL_OK")
</pallas_src>

<mosaic_0001>
module attributes {stable_mosaic.version = 11 : i64} {
  func.func @_dense_kernel(%arg0: i32, %arg1: memref<16x32xf32, #tpu.memory_space<vmem>>, %arg2: memref<32x32xf32, #tpu.memory_space<vmem>>, %arg3: memref<1x32xf32, #tpu.memory_space<vmem>>, %arg4: memref<16x32xf32, #tpu.memory_space<vmem>>) attributes {dimension_semantics = [#tpu.dimension_semantics<parallel>], iteration_bounds = array<i64: 1>, scalar_prefetch = 0 : i64, scratch_operands = 0 : i64, tpu.core_type = #tpu.core_type<tc>, window_params = [{transform_indices = @transform_0, window_bounds = array<i64: 16, 32>}, {pipeline_mode = #tpu.pipeline_mode<synchronous>, transform_indices = @transform_1, window_bounds = array<i64: 32, 32>}, {pipeline_mode = #tpu.pipeline_mode<synchronous>, transform_indices = @transform_2, window_bounds = array<i64: 1, 32>}, {transform_indices = @transform_3, window_bounds = array<i64: 16, 32>}]} {
    %c0 = arith.constant 0 : index
    %c0_0 = arith.constant 0 : index
    %0 = vector.load %arg1[%c0, %c0_0] : memref<16x32xf32, #tpu.memory_space<vmem>>, vector<16x32xf32>
    %c0_1 = arith.constant 0 : index
    %c0_2 = arith.constant 0 : index
    %1 = vector.load %arg2[%c0_1, %c0_2] : memref<32x32xf32, #tpu.memory_space<vmem>>, vector<32x32xf32>
    %cst = arith.constant dense<0.000000e+00> : vector<16x32xf32>
    %2 = tpu.matmul %0, %1, %cst {dimension_numbers = #tpu.dot_dimension_numbers<[1], [0], [0], [1], [0, 0, 1, 1], [], []>} : vector<16x32xf32>, vector<32x32xf32>, vector<16x32xf32> -> vector<16x32xf32>
    %c0_3 = arith.constant 0 : index
    %c0_4 = arith.constant 0 : index
    %3 = vector.load %arg3[%c0_3, %c0_4] : memref<1x32xf32, #tpu.memory_space<vmem>>, vector<1x32xf32>
    %4 = vector.broadcast %3 : vector<1x32xf32> to vector<16x32xf32>
    %5 = arith.addf %2, %4 : vector<16x32xf32>
    %c0_5 = arith.constant 0 : index
    %c0_6 = arith.constant 0 : index
    %6 = vector.load %arg4[%c0_5, %c0_6] : memref<16x32xf32, #tpu.memory_space<vmem>>, vector<16x32xf32>
    tpu.vector_store %arg4[%c0_5, %c0_6], %5 {strides = array<i32>} : memref<16x32xf32, #tpu.memory_space<vmem>>, vector<16x32xf32>,
    return
  }
  func.func @transform_0(%arg0: i32) -> (i32, i32) {
    %c0_i32 = arith.constant 0 : i32
    %c0_i32_0 = arith.constant 0 : i32
    return %arg0, %c0_i32 : i32, i32
  }
  func.func @transform_1(%arg0: i32) -> (i32, i32) {
    %c0_i32 = arith.constant 0 : i32
    %c0_i32_0 = arith.constant 0 : i32
    %c0_i32_1 = arith.constant 0 : i32
    return %c0_i32, %c0_i32_0 : i32, i32
  }
  func.func @transform_2(%arg0: i32) -> (i32, i32) {
    %c0_i32 = arith.constant 0 : i32
    %c0_i32_0 = arith.constant 0 : i32
    %c0_i32_1 = arith.constant 0 : i32
    return %c0_i32, %c0_i32_0 : i32, i32
  }
  func.func @transform_3(%arg0: i32) -> (i32, i32) {
    %c0_i32 = arith.constant 0 : i32
    %c0_i32_0 = arith.constant 0 : i32
    return %arg0, %c0_i32 : i32, i32
  }
}

</mosaic_0001>

<llo_original>
// kernel: tpu_custom_call.1
$region0: #{tpu_custom_call.1}
  #allocation0 [shape = 'u32[]', space=smem, size = 0x4, offset = 0x4, fixed_abs, tag = 'smem constant byte address 0x4 - core index']
  #allocation1 [shape = 'u32[144,128]{1,0:T(1,128)}', space=vmem, size = 0x12000, scoped, tag = 'internal scratch']
  %s0 = inlined_call_operand.hbm [shape: f32[16,32], index: 0, kind: input, shape index: {}]
  %s1 = inlined_call_operand.hbm [shape: f32[32,32], index: 1, kind: input, shape index: {}]
  %s2 = inlined_call_operand.vmem [shape: f32[1,32], index: 2, kind: input, shape index: {}]
  %s3 = inlined_call_operand.hbm [shape: f32[16,32], index: 3, kind: output, shape index: {}]
  %s4 = sld [smem:[#allocation0]]
  $region30: #{tpu_custom_call.1} parent=0
    _
  %s6 = ssub.s32 1, %s4
  %s7 = scalar_select 0, %s6, %s4
  $region1: #{tpu_custom_call.1} parent=0
    #allocation2 [shape = 'u8[8192]{0}', space=vmem, size = 0x2000, scoped, tag = 'input window, operand 0, single buffered']
    #allocation3 [shape = 's32[1]{0}', space=sflag, size = 0x4, scoped, tag = 'scoped memory for tpu_custom_call.1']
    #allocation4 [shape = 's32[1]{0}', space=sflag, size = 0x4, scoped, tag = 'scoped memory for tpu_custom_call.1']
    #allocation5 [shape = 'u8[16384]{0}', space=vmem, size = 0x4000, scoped, tag = 'input window, operand 1, single buffered']
    #allocation6 [shape = 's32[1]{0}', space=sflag, size = 0x4, scoped, tag = 'scoped memory for tpu_custom_call.1']
    #allocation7 [shape = 'u8[8192]{0}', space=vmem, size = 0x2000, scoped, tag = 'output window, operand 0, single buffered']
    %8 = vsyncpa [#allocation3], 0
    %9 = vsyncpa [#allocation6], 0
    %10 = vsyncpa [#allocation4], 0
    // Predicated region
    $region2: #{tpu_custom_call.1} parent=1 // pred_check
      _
    $region3: #{tpu_custom_call.1} parent=1 // pred_check_branch
      %12 = sbr.rel (0) target = $region5
    $region4: #{tpu_custom_call.1} parent=1 // pred_region
      %s14 = ssub.s32 256, 256
      %15 = vsyncadd [#allocation3], %s14
      %s16 = sshll.u32 [#allocation2], 4
      %s17 = int_to_ptr.vmem [resolvable:$true] %s16
      %22 = dma.hbm_to_vmem [thread:$0]  %s0, 256, %s17, [#allocation3], 128, 128, 8
    $region5: #{tpu_custom_call.1} parent=1 // pred_fallthru
      _
    // Predicated region
    $region6: #{tpu_custom_call.1} parent=1 // pred_check
      _
    $region7: #{tpu_custom_call.1} parent=1 // pred_check_branch
      %24 = sbr.rel (0) target = $region9
    $region8: #{tpu_custom_call.1} parent=1 // pred_region
      %s26 = ssub.s32 512, 512
      %27 = vsyncadd [#allocation6], %s26
      %s28 = sshll.u32 [#allocation5], 4
      %s29 = int_to_ptr.vmem [resolvable:$true] %s28
      %34 = dma.hbm_to_vmem [thread:$0]  %s1, 512, %s29, [#allocation6], 128, 128, 8
    $region9: #{tpu_custom_call.1} parent=1 // pred_fallthru
      _
    // Predicated region
    $region10: #{tpu_custom_call.1} parent=1 // pred_check
      _
    $region11: #{tpu_custom_call.1} parent=1 // pred_check_branch
      %36 = sbr.rel (0) target = $region13
    $region12: #{tpu_custom_call.1} parent=1 // pred_region
      _
    $region13: #{tpu_custom_call.1} parent=1 // pred_fallthru
      _
    // Predicated region
    $region14: #{tpu_custom_call.1} parent=1 // pred_check
      _
    $region15: #{tpu_custom_call.1} parent=1 // pred_check_branch
      %38 = sbr.rel (0) target = $region17
    $region16: #{tpu_custom_call.1} parent=1 // pred_region
      %39 = dma.done [#allocation3], 256
    $region17: #{tpu_custom_call.1} parent=1 // pred_fallthru
      _
    // Predicated region
    $region18: #{tpu_custom_call.1} parent=1 // pred_check
      _
    $region19: #{tpu_custom_call.1} parent=1 // pred_check_branch
      %41 = sbr.rel (0) target = $region21
    $region20: #{tpu_custom_call.1} parent=1 // pred_region
      %42 = dma.done [#allocation6], 512
    $region21: #{tpu_custom_call.1} parent=1 // pred_fallthru
      _
    %v43 = vld [vmem:[#allocation2] sm:$0xff]
    %v44 = vld [vmem:[#allocation2 + $0x8] sm:$0xff]
    %v45 = vld [vmem:[#allocation5] sm:$0xff]
    %v46 = vld [vmem:[#allocation5 + $0x8] sm:$0xff]
    %v47 = vld [vmem:[#allocation5 + $0x10] sm:$0xff]
    %v48 = vld [vmem:[#allocation5 + $0x18] sm:$0xff]
    %v49 = vld [vmem:[%s2] sm:$0x1]
    %v51 = vlaneseq
    %v52 = vshrl.u32 %v51, 7
    %v53 = vsub.s32 0, %v52
    %v54 = vrot.slane %v49, %v53
    %vm56 = vcmask 261120
    %v58 = vsel %vm56, %v43, 0
    %v61 = vsel %vm56, %v44, 0
    %63 = vmatprep.subr.mxu0 0.0
    %64 = vmatpush1.msra.mxu0 %v45
    %65 = vmatprep.subr.mxu0 0.0
    %66 = vmatpush1.msra.mxu0 %v46
    %67 = vmatprep.subr.mxu0 0.0
    %68 = vmatpush1.msra.mxu0 %v47
    %69 = vmatprep.subr.mxu0 0.0
    %70 = vmatpush1.msra.mxu0 %v48
    %71 = vmatprep.subr.mxu0 0.0
    %72 = vmatpush1.msra.mxu0 0.0
    %73 = vmatprep.subr.mxu0 0.0
    %74 = vmatpush1.msra.mxu0 0.0
    %75 = vmatprep.subr.mxu0 0.0
    %76 = vmatpush1.msra.mxu0 0.0
    %77 = vmatprep.subr.mxu0 0.0
    %78 = vmatpush1.msra.mxu0 0.0
    %79 = vmatprep.subr.mxu0 0.0
    %80 = vmatpush1.msra.mxu0 0.0
    %81 = vmatprep.subr.mxu0 0.0
    %82 = vmatpush1.msra.mxu0 0.0
    %83 = vmatprep.subr.mxu0 0.0
    %84 = vmatpush1.msra.mxu0 0.0
    %85 = vmatprep.subr.mxu0 0.0
    %86 = vmatpush1.msra.mxu0 0.0
    %87 = vmatprep.subr.mxu0 0.0
    %88 = vmatpush1.msra.mxu0 0.0
    %89 = vmatprep.subr.mxu0 0.0
    %90 = vmatpush1.msra.mxu0 0.0
    %91 = vmatprep.subr.mxu0 0.0
    %92 = vmatpush1.msra.mxu0 0.0
    %93 = vmatprep.subr.mxu0 0.0
    %94 = vmatpush1.msra.mxu0 0.0
    %95 = vmatprep.subr.mxu0 0.0
    %96 = vmatpush1.msra.mxu0 0.0
    %97 = vmatprep.subr.mxu0 0.0
    %98 = vmatpush1.msra.mxu0 0.0
    %99 = vmatprep.subr.mxu0 0.0
    %100 = vmatpush1.msra.mxu0 0.0
    %101 = vmatprep.subr.mxu0 0.0
    %102 = vmatpush1.msra.mxu0 0.0
    %103 = vmatprep.subr.mxu0 0.0
    %104 = vmatpush1.msra.mxu0 0.0
    %105 = vmatprep.subr.mxu0 0.0
    %106 = vmatpush1.msra.mxu0 0.0
    %107 = vmatprep.subr.mxu0 0.0
    %108 = vmatpush1.msra.mxu0 0.0
    %109 = vmatprep.subr.mxu0 0.0
    %110 = vmatpush1.msra.mxu0 0.0
    %111 = vmatprep.subr.mxu0 0.0
    %112 = vmatpush1.msra.mxu0 0.0
    %113 = vmatprep.subr.mxu0 0.0
    %114 = vmatpush1.msra.mxu0 0.0
    %115 = vmatprep.subr.mxu0 0.0
    %116 = vmatpush1.msra.mxu0 0.0
    %117 = vmatprep.subr.mxu0 0.0
    %118 = vmatpush1.msra.mxu0 0.0
    %119 = vmatprep.subr.mxu0 0.0
    %120 = vmatpush1.msra.mxu0 0.0
    %121 = vmatprep.subr.mxu0 0.0
    %122 = vmatpush1.msra.mxu0 0.0
    %123 = vmatprep.subr.mxu0 0.0
    %124 = vmatpush1.msra.mxu0 0.0
    %125 = vmatprep.subr.mxu0 0.0
    %126 = vmatpush1.msra.mxu0 0.0
    %127 = vmatprep.mubr.f32.mxu0 0.0
    %128 = vmatmul.mubr.f32.gmra.mrb[0].mxu0 %v58
    %v129 = vpop.f32.mrb[0].mxu0
    %v130 = vadd.f32 %v54, %v129
    %v131 = vpop.f32.mrb[0].mxu0
    %132 = vmatprep.mubr.f32.mxu0 0.0
    %133 = vmatmul.mubr.f32.gmra.mrb[0].mxu0 %v61
    %v134 = vpop.f32.mrb[0].mxu0
    %v135 = vadd.f32 %v54, %v134
    %v136 = vpop.f32.mrb[0].mxu0
    %137 = vdwg.mxu0
    %138 = vst.msk [vmem:[#allocation7] sm:$0xff] %vm56, %v130
    %139 = vst.msk [vmem:[#allocation7 + $0x8] sm:$0xff] %vm56, %v135
    // Predicated region
    $region22: #{tpu_custom_call.1} parent=1 // pred_check
      _
    $region23: #{tpu_custom_call.1} parent=1 // pred_check_branch
      %141 = sbr.rel (0) target = $region25
    $region24: #{tpu_custom_call.1} parent=1 // pred_region
      %s143 = ssub.s32 256, 256
      %144 = vsyncadd [#allocation4], %s143
      %s145 = sshll.u32 [#allocation7], 4
      %s146 = int_to_ptr.vmem [resolvable:$true] %s145
      %151 = dma.vmem_to_hbm [thread:$0]  %s146, 256, %s3, [#allocation4], 128, 128, 8
    $region25: #{tpu_custom_call.1} parent=1 // pred_fallthru
      _
    // Predicated region
    $region26: #{tpu_custom_call.1} parent=1 // pred_check
      _
    $region27: #{tpu_custom_call.1} parent=1 // pred_check_branch
      %153 = sbr.rel (0) target = $region29
    $region28: #{tpu_custom_call.1} parent=1 // pred_region
      %154 = dma.done [#allocation4], 256
    $region29: #{tpu_custom_call.1} parent=1 // pred_fallthru
      _
    %155 = vsyncpa [#allocation3], 1
    %156 = vsyncpa [#allocation6], 1
    %157 = vsyncpa [#allocation4], 1

</llo_original>
